<compile_context>
chip_gen: v7x
topology: tpu7x:2x2x1
jax: 0.10.0
libtpu: 0.0.40
codegen_flags: <defaults>
</compile_context>

<pallas_src>
import math

import jax
import jax.numpy as jnp
from jax.experimental import pallas as pl
from jax.experimental.pallas import tpu as pltpu

K_IN = 28 * 28          # 784 — un-padded reduction dim (== full last dim of x)
N_OUT = 10
N_PAD = 128             # lane-dense output width
TM_MAX = 1024           # per-step batch tile for large B (near HBM roofline)


def _round_up(x, m):
    return ((x + m - 1) // m) * m


def _linear_relu_kernel(x_ref, w_ref, b_ref, o_ref):
    # x_ref: (TM, 784)  w_ref: (784, 128)  b_ref: (1, 128)  o_ref: (TM, 128)
    y = jnp.dot(x_ref[...], w_ref[...], preferred_element_type=jnp.float32)
    o_ref[...] = jnp.maximum(y + b_ref[...], 0.0).astype(o_ref.dtype)


def pad_params(w, b):
    """One-time lane-dense padding of params: (784,10)->(784,128), (10,)->(1,128).

    Hoisted out of the per-call path; call once after init / checkpoint load.
    Zero padding keeps the dot product and relu(0)=0 exact in padded columns.
    """
    w_p = jnp.zeros((K_IN, N_PAD), jnp.float32).at[:, :N_OUT].set(w)
    b_p = jnp.zeros((1, N_PAD), jnp.float32).at[0, :N_OUT].set(b)
    return w_p, b_p


def mnist_forward(x, w_p, b_p):
    """x: (B, 1, 28, 28) f32 NCHW; w_p: (784, 128); b_p: (1, 128) -> (B, 10)."""
    B = x.shape[0]
    x_flat = x.reshape(B, -1)                      # (B, 784), same as torch .view

    # Batch tile: exact single block for tiny batches; otherwise >= 2 grid
    # steps so the "parallel" axis feeds both v7x TensorCores; cap at TM_MAX.
    if B <= 8:
        TM = B                                     # block == full array dims
    elif B <= 2 * TM_MAX:
        TM = _round_up(pl.cdiv(B, 2), 8)
    else:
        TM = TM_MAX
    grid = (pl.cdiv(B, TM),)

    rows = grid[0] * TM                            # rows streamed (incl. masked tail)
    cost = pl.CostEstimate(
        flops=2 * rows * K_IN * N_PAD,             # padded MXU work actually issued
        transcendentals=0,
        bytes_accessed=B * K_IN * 4 + K_IN * N_PAD * 4 + B * N_PAD * 4,
    )

    out_pad = pl.pallas_call(
        _linear_relu_kernel,
        out_shape=jax.ShapeDtypeStruct((B, N_PAD), jnp.float32),
        grid=grid,
        in_specs=[
            # Streamed, double-buffered x tiles; partial final block is
            # read-padded and its extra output rows are masked on store.
            pl.BlockSpec((TM, K_IN), lambda i: (i, 0)),
            # Resident weight / bias: constant index_map, single-buffered.
            pl.BlockSpec((K_IN, N_PAD), lambda i: (0, 0),
                         pipeline_mode=pl.Buffered(1)),
            pl.BlockSpec((1, N_PAD), lambda i: (0, 0),
                         pipeline_mode=pl.Buffered(1)),
        ],
        out_specs=pl.BlockSpec((TM, N_PAD), lambda i: (i, 0)),
        compiler_params=pltpu.CompilerParams(
            dimension_semantics=("parallel",),     # megacore sharding on v7x
        ),
        cost_estimate=cost,
    )(x_flat, w_p, b_p)

    return out_pad[:, :N_OUT]


def init_params(key):
    """Deterministic init matching torch.nn.Linear(784, 10) default scheme."""
    k_w, k_b = jax.random.split(key)
    bound = 1.0 / math.sqrt(K_IN)
    # torch stores (out, in); we store transposed (in, out) for x @ W.
    w = jax.random.uniform(k_w, (K_IN, N_OUT), jnp.float32, -bound, bound)
    b = jax.random.uniform(k_b, (N_OUT,), jnp.float32, -bound, bound)
    return w, b


if __name__ == "__main__":
    key = jax.random.PRNGKey(0)
    k_x, k_p = jax.random.split(key)

    # Small MNIST-like batch: (batch=2, channels=1, 28, 28), NCHW.
    B = 2
    x = jax.random.normal(k_x, (B, 1, 28, 28), jnp.float32)
    w, b = init_params(k_p)
    w_p, b_p = pad_params(w, b)       # padded once, outside the forward path

    out = mnist_forward(x, w_p, b_p)
    out = jax.block_until_ready(out)

    # Sanity check against plain-JAX reference of the same math.
    ref = jnp.maximum(x.reshape(B, -1) @ w + b, 0.0)
    assert out.shape == (B, N_OUT)
    assert jnp.allclose(out, ref, atol=1e-5, rtol=1e-5)

    print("KERNEL_OK")
</pallas_src>

<mosaic_0001>
module attributes {stable_mosaic.version = 11 : i64} {
  func.func @_linear_relu_kernel(%arg0: i32, %arg1: memref<2x784xf32, #tpu.memory_space<vmem>>, %arg2: memref<784x128xf32, #tpu.memory_space<vmem>>, %arg3: memref<1x128xf32, #tpu.memory_space<vmem>>, %arg4: memref<2x128xf32, #tpu.memory_space<vmem>>) attributes {dimension_semantics = [#tpu.dimension_semantics<parallel>], iteration_bounds = array<i64: 1>, scalar_prefetch = 0 : i64, scratch_operands = 0 : i64, tpu.core_type = #tpu.core_type<tc>, window_params = [{transform_indices = @transform_0, window_bounds = array<i64: 2, 784>}, {pipeline_mode = #tpu.pipeline_mode<synchronous>, transform_indices = @transform_1, window_bounds = array<i64: 784, 128>}, {pipeline_mode = #tpu.pipeline_mode<synchronous>, transform_indices = @transform_2, window_bounds = array<i64: 1, 128>}, {transform_indices = @transform_3, window_bounds = array<i64: 2, 128>}]} {
    %c0 = arith.constant 0 : index
    %c0_0 = arith.constant 0 : index
    %0 = vector.load %arg1[%c0, %c0_0] : memref<2x784xf32, #tpu.memory_space<vmem>>, vector<2x784xf32>
    %c0_1 = arith.constant 0 : index
    %c0_2 = arith.constant 0 : index
    %1 = vector.load %arg2[%c0_1, %c0_2] : memref<784x128xf32, #tpu.memory_space<vmem>>, vector<784x128xf32>
    %cst = arith.constant dense<0.000000e+00> : vector<2x128xf32>
    %2 = tpu.matmul %0, %1, %cst {dimension_numbers = #tpu.dot_dimension_numbers<[1], [0], [0], [1], [0, 0, 1, 1], [], []>} : vector<2x784xf32>, vector<784x128xf32>, vector<2x128xf32> -> vector<2x128xf32>
    %c0_3 = arith.constant 0 : index
    %c0_4 = arith.constant 0 : index
    %3 = vector.load %arg3[%c0_3, %c0_4] : memref<1x128xf32, #tpu.memory_space<vmem>>, vector<1x128xf32>
    %4 = vector.broadcast %3 : vector<1x128xf32> to vector<2x128xf32>
    %5 = arith.addf %2, %4 : vector<2x128xf32>
    %cst_5 = arith.constant 0.000000e+00 : f32
    %6 = vector.broadcast %cst_5 : f32 to vector<2x128xf32>
    %7 = arith.maximumf %5, %6 : vector<2x128xf32>
    %c0_6 = arith.constant 0 : index
    %c0_7 = arith.constant 0 : index
    %8 = vector.load %arg4[%c0_6, %c0_7] : memref<2x128xf32, #tpu.memory_space<vmem>>, vector<2x128xf32>
    tpu.vector_store %arg4[%c0_6, %c0_7], %7 {strides = array<i32>} : memref<2x128xf32, #tpu.memory_space<vmem>>, vector<2x128xf32>,
    return
  }
  func.func @transform_0(%arg0: i32) -> (i32, i32) {
    %c0_i32 = arith.constant 0 : i32
    %c0_i32_0 = arith.constant 0 : i32
    return %arg0, %c0_i32 : i32, i32
  }
  func.func @transform_1(%arg0: i32) -> (i32, i32) {
    %c0_i32 = arith.constant 0 : i32
    %c0_i32_0 = arith.constant 0 : i32
    %c0_i32_1 = arith.constant 0 : i32
    return %c0_i32, %c0_i32_0 : i32, i32
  }
  func.func @transform_2(%arg0: i32) -> (i32, i32) {
    %c0_i32 = arith.constant 0 : i32
    %c0_i32_0 = arith.constant 0 : i32
    %c0_i32_1 = arith.constant 0 : i32
    return %c0_i32, %c0_i32_0 : i32, i32
  }
  func.func @transform_3(%arg0: i32) -> (i32, i32) {
    %c0_i32 = arith.constant 0 : i32
    %c0_i32_0 = arith.constant 0 : i32
    return %arg0, %c0_i32 : i32, i32
  }
}

</mosaic_0001>

<llo_original>
// kernel: tpu_custom_call.1
$region0: #{tpu_custom_call.1}
  #allocation0 [shape = 'u32[]', space=smem, size = 0x4, offset = 0x4, fixed_abs, tag = 'smem constant byte address 0x4 - core index']
  #allocation1 [shape = 'u32[144,128]{1,0:T(1,128)}', space=vmem, size = 0x12000, scoped, tag = 'internal scratch']
  %s0 = inlined_call_operand.hbm [shape: f32[2,784], index: 0, kind: input, shape index: {}]
  %s1 = inlined_call_operand.hbm [shape: f32[784,128], index: 1, kind: input, shape index: {}]
  %s2 = inlined_call_operand.vmem [shape: f32[1,128], index: 2, kind: input, shape index: {}]
  %s3 = inlined_call_operand.hbm [shape: f32[2,128], index: 3, kind: output, shape index: {}]
  %s4 = sld [smem:[#allocation0]]
  $region30: #{tpu_custom_call.1} parent=0
    _
  %s6 = ssub.s32 1, %s4
  %s7 = scalar_select 0, %s6, %s4
  $region1: #{tpu_custom_call.1} parent=0
    #allocation2 [shape = 'u8[7168]{0}', space=vmem, size = 0x1c00, scoped, tag = 'input window, operand 0, single buffered']
    #allocation3 [shape = 's32[1]{0}', space=sflag, size = 0x4, scoped, tag = 'scoped memory for tpu_custom_call.1']
    #allocation4 [shape = 's32[1]{0}', space=sflag, size = 0x4, scoped, tag = 'scoped memory for tpu_custom_call.1']
    #allocation5 [shape = 'u8[401408]{0}', space=vmem, size = 0x62000, scoped, tag = 'input window, operand 1, single buffered']
    #allocation6 [shape = 's32[1]{0}', space=sflag, size = 0x4, scoped, tag = 'scoped memory for tpu_custom_call.1']
    #allocation7 [shape = 'u8[1024]{0}', space=vmem, size = 0x400, scoped, tag = 'output window, operand 0, single buffered']
    %8 = vsyncpa [#allocation3], 0
    %9 = vsyncpa [#allocation6], 0
    %10 = vsyncpa [#allocation4], 0
    // Predicated region
    $region2: #{tpu_custom_call.1} parent=1 // pred_check
      _
    $region3: #{tpu_custom_call.1} parent=1 // pred_check_branch
      %12 = sbr.rel (0) target = $region5
    $region4: #{tpu_custom_call.1} parent=1 // pred_region
      %s14 = ssub.s32 224, 224
      %15 = vsyncadd [#allocation3], %s14
      %s17 = sshll.u32 [#allocation2], 4
      %s18 = int_to_ptr.vmem [resolvable:$true] %s17
      %20 = dma.hbm_to_vmem [thread:$0]  %s0, 224, %s18, [#allocation3]
    $region5: #{tpu_custom_call.1} parent=1 // pred_fallthru
      _
    // Predicated region
    $region6: #{tpu_custom_call.1} parent=1 // pred_check
      _
    $region7: #{tpu_custom_call.1} parent=1 // pred_check_branch
      %22 = sbr.rel (0) target = $region9
    $region8: #{tpu_custom_call.1} parent=1 // pred_region
      %s24 = ssub.s32 12544, 12544
      %25 = vsyncadd [#allocation6], %s24
      %s26 = sshll.u32 [#allocation5], 4
      %s27 = int_to_ptr.vmem [resolvable:$true] %s26
      %32 = dma.hbm_to_vmem [thread:$0]  %s1, 12544, %s27, [#allocation6], 128, 128, 8
    $region9: #{tpu_custom_call.1} parent=1 // pred_fallthru
      _
    // Predicated region
    $region10: #{tpu_custom_call.1} parent=1 // pred_check
      _
    $region11: #{tpu_custom_call.1} parent=1 // pred_check_branch
      %34 = sbr.rel (0) target = $region13
    $region12: #{tpu_custom_call.1} parent=1 // pred_region
      _
    $region13: #{tpu_custom_call.1} parent=1 // pred_fallthru
      _
    // Predicated region
    $region14: #{tpu_custom_call.1} parent=1 // pred_check
      _
    $region15: #{tpu_custom_call.1} parent=1 // pred_check_branch
      %36 = sbr.rel (0) target = $region17
    $region16: #{tpu_custom_call.1} parent=1 // pred_region
      %37 = dma.done [#allocation3], 224
    $region17: #{tpu_custom_call.1} parent=1 // pred_fallthru
      _
    // Predicated region
    $region18: #{tpu_custom_call.1} parent=1 // pred_check
      _
    $region19: #{tpu_custom_call.1} parent=1 // pred_check_branch
      %39 = sbr.rel (0) target = $region21
    $region20: #{tpu_custom_call.1} parent=1 // pred_region
      %40 = dma.done [#allocation6], 12544
    $region21: #{tpu_custom_call.1} parent=1 // pred_fallthru
      _
    %v41 = vld [vmem:[#allocation2] sm:$0xff]
    %v42 = vld [vmem:[#allocation2 + $0x8] sm:$0x3f]
    %v43 = vld [vmem:[#allocation5] sm:$0xff]
    %v44 = vld [vmem:[#allocation5 + $0x8] sm:$0xff]
    %v45 = vld [vmem:[#allocation5 + $0x10] sm:$0xff]
    %v46 = vld [vmem:[#allocation5 + $0x18] sm:$0xff]
    %v47 = vld [vmem:[#allocation5 + $0x20] sm:$0xff]
    %v48 = vld [vmem:[#allocation5 + $0x28] sm:$0xff]
    %v49 = vld [vmem:[#allocation5 + $0x30] sm:$0xff]
    %v50 = vld [vmem:[#allocation5 + $0x38] sm:$0xff]
    %v51 = vld [vmem:[#allocation5 + $0x40] sm:$0xff]
    %v52 = vld [vmem:[#allocation5 + $0x48] sm:$0xff]
    %v53 = vld [vmem:[#allocation5 + $0x50] sm:$0xff]
    %v54 = vld [vmem:[#allocation5 + $0x58] sm:$0xff]
    %v55 = vld [vmem:[#allocation5 + $0x60] sm:$0xff]
    %v56 = vld [vmem:[#allocation5 + $0x68] sm:$0xff]
    %v57 = vld [vmem:[#allocation5 + $0x70] sm:$0xff]
    %v58 = vld [vmem:[#allocation5 + $0x78] sm:$0xff]
    %v59 = vld [vmem:[#allocation5 + $0x80] sm:$0xff]
    %v60 = vld [vmem:[#allocation5 + $0x88] sm:$0xff]
    %v61 = vld [vmem:[#allocation5 + $0x90] sm:$0xff]
    %v62 = vld [vmem:[#allocation5 + $0x98] sm:$0xff]
    %v63 = vld [vmem:[#allocation5 + $0xa0] sm:$0xff]
    %v64 = vld [vmem:[#allocation5 + $0xa8] sm:$0xff]
    %v65 = vld [vmem:[#allocation5 + $0xb0] sm:$0xff]
    %v66 = vld [vmem:[#allocation5 + $0xb8] sm:$0xff]
    %v67 = vld [vmem:[#allocation5 + $0xc0] sm:$0xff]
    %v68 = vld [vmem:[#allocation5 + $0xc8] sm:$0xff]
    %v69 = vld [vmem:[#allocation5 + $0xd0] sm:$0xff]
    %v70 = vld [vmem:[#allocation5 + $0xd8] sm:$0xff]
    %v71 = vld [vmem:[#allocation5 + $0xe0] sm:$0xff]
    %v72 = vld [vmem:[#allocation5 + $0xe8] sm:$0xff]
    %v73 = vld [vmem:[#allocation5 + $0xf0] sm:$0xff]
    %v74 = vld [vmem:[#allocation5 + $0xf8] sm:$0xff]
    %v75 = vld [vmem:[#allocation5 + $0x100] sm:$0xff]
    %v76 = vld [vmem:[#allocation5 + $0x108] sm:$0xff]
    %v77 = vld [vmem:[#allocation5 + $0x110] sm:$0xff]
    %v78 = vld [vmem:[#allocation5 + $0x118] sm:$0xff]
    %v79 = vld [vmem:[#allocation5 + $0x120] sm:$0xff]
    %v80 = vld [vmem:[#allocation5 + $0x128] sm:$0xff]
    %v81 = vld [vmem:[#allocation5 + $0x130] sm:$0xff]
    %v82 = vld [vmem:[#allocation5 + $0x138] sm:$0xff]
    %v83 = vld [vmem:[#allocation5 + $0x140] sm:$0xff]
    %v84 = vld [vmem:[#allocation5 + $0x148] sm:$0xff]
    %v85 = vld [vmem:[#allocation5 + $0x150] sm:$0xff]
    %v86 = vld [vmem:[#allocation5 + $0x158] sm:$0xff]
    %v87 = vld [vmem:[#allocation5 + $0x160] sm:$0xff]
    %v88 = vld [vmem:[#allocation5 + $0x168] sm:$0xff]
    %v89 = vld [vmem:[#allocation5 + $0x170] sm:$0xff]
    %v90 = vld [vmem:[#allocation5 + $0x178] sm:$0xff]
    %v91 = vld [vmem:[#allocation5 + $0x180] sm:$0xff]
    %v92 = vld [vmem:[#allocation5 + $0x188] sm:$0xff]
    %v93 = vld [vmem:[#allocation5 + $0x190] sm:$0xff]
    %v94 = vld [vmem:[#allocation5 + $0x198] sm:$0xff]
    %v95 = vld [vmem:[#allocation5 + $0x1a0] sm:$0xff]
    %v96 = vld [vmem:[#allocation5 + $0x1a8] sm:$0xff]
    %v97 = vld [vmem:[#allocation5 + $0x1b0] sm:$0xff]
    %v98 = vld [vmem:[#allocation5 + $0x1b8] sm:$0xff]
    %v99 = vld [vmem:[#allocation5 + $0x1c0] sm:$0xff]
    %v100 = vld [vmem:[#allocation5 + $0x1c8] sm:$0xff]
    %v101 = vld [vmem:[#allocation5 + $0x1d0] sm:$0xff]
    %v102 = vld [vmem:[#allocation5 + $0x1d8] sm:$0xff]
    %v103 = vld [vmem:[#allocation5 + $0x1e0] sm:$0xff]
    %v104 = vld [vmem:[#allocation5 + $0x1e8] sm:$0xff]
    %v105 = vld [vmem:[#allocation5 + $0x1f0] sm:$0xff]
    %v106 = vld [vmem:[#allocation5 + $0x1f8] sm:$0xff]
    %v107 = vld [vmem:[#allocation5 + $0x200] sm:$0xff]
    %v108 = vld [vmem:[#allocation5 + $0x208] sm:$0xff]
    %v109 = vld [vmem:[#allocation5 + $0x210] sm:$0xff]
    %v110 = vld [vmem:[#allocation5 + $0x218] sm:$0xff]
    %v111 = vld [vmem:[#allocation5 + $0x220] sm:$0xff]
    %v112 = vld [vmem:[#allocation5 + $0x228] sm:$0xff]
    %v113 = vld [vmem:[#allocation5 + $0x230] sm:$0xff]
    %v114 = vld [vmem:[#allocation5 + $0x238] sm:$0xff]
    %v115 = vld [vmem:[#allocation5 + $0x240] sm:$0xff]
    %v116 = vld [vmem:[#allocation5 + $0x248] sm:$0xff]
    %v117 = vld [vmem:[#allocation5 + $0x250] sm:$0xff]
    %v118 = vld [vmem:[#allocation5 + $0x258] sm:$0xff]
    %v119 = vld [vmem:[#allocation5 + $0x260] sm:$0xff]
    %v120 = vld [vmem:[#allocation5 + $0x268] sm:$0xff]
    %v121 = vld [vmem:[#allocation5 + $0x270] sm:$0xff]
    %v122 = vld [vmem:[#allocation5 + $0x278] sm:$0xff]
    %v123 = vld [vmem:[#allocation5 + $0x280] sm:$0xff]
    %v124 = vld [vmem:[#allocation5 + $0x288] sm:$0xff]
    %v125 = vld [vmem:[#allocation5 + $0x290] sm:$0xff]
    %v126 = vld [vmem:[#allocation5 + $0x298] sm:$0xff]
    %v127 = vld [vmem:[#allocation5 + $0x2a0] sm:$0xff]
    %v128 = vld [vmem:[#allocation5 + $0x2a8] sm:$0xff]
    %v129 = vld [vmem:[#allocation5 + $0x2b0] sm:$0xff]
    %v130 = vld [vmem:[#allocation5 + $0x2b8] sm:$0xff]
    %v131 = vld [vmem:[#allocation5 + $0x2c0] sm:$0xff]
    %v132 = vld [vmem:[#allocation5 + $0x2c8] sm:$0xff]
    %v133 = vld [vmem:[#allocation5 + $0x2d0] sm:$0xff]
    %v134 = vld [vmem:[#allocation5 + $0x2d8] sm:$0xff]
    %v135 = vld [vmem:[#allocation5 + $0x2e0] sm:$0xff]
    %v136 = vld [vmem:[#allocation5 + $0x2e8] sm:$0xff]
    %v137 = vld [vmem:[#allocation5 + $0x2f0] sm:$0xff]
    %v138 = vld [vmem:[#allocation5 + $0x2f8] sm:$0xff]
    %v139 = vld [vmem:[#allocation5 + $0x300] sm:$0xff]
    %v140 = vld [vmem:[#allocation5 + $0x308] sm:$0xff]
    %v141 = vld [vmem:[%s2] sm:$0x1]
    %v143 = vlaneseq
    %v144 = vshrl.u32 %v143, 7
    %v145 = vsub.s32 0, %v144
    %v146 = vrot.slane %v141, %v145
    %v150 = vcombine.high %v41, %v41
    %v152 = vunpack.c.l.s4 1983009808
    %v153 = vunpack.c.0.s8 %v152
    %v154 = vlaneseq
    %v155 = vshrl.u32 %v154, 7
    %v156 = vsub.s32 %v153, %v155
    %v157 = vrot.slane %v41, %v156
    %v159 = vunpack.c.l.s4 1983009808
    %v160 = vunpack.c.0.s8 %v159
    %v161 = vlaneseq
    %v162 = vshrl.u32 %v161, 7
    %v163 = vsub.s32 %v160, %v162
    %v164 = vrot.slane %v150, %v163
    %v165 = vcombine.high %v157, %v157
    %v166 = vcombine.high %v164, %v164
    %v167 = vcombine.high %v42, %v42
    %v169 = vunpack.c.l.s4 1983009808
    %v170 = vunpack.c.0.s8 %v169
    %v171 = vlaneseq
    %v172 = vshrl.u32 %v171, 7
    %v173 = vsub.s32 %v170, %v172
    %v174 = vrot.slane %v42, %v173
    %v176 = vunpack.c.l.s4 1983009808
    %v177 = vunpack.c.0.s8 %v176
    %v178 = vlaneseq
    %v179 = vshrl.u32 %v178, 7
    %v180 = vsub.s32 %v177, %v179
    %v181 = vrot.slane %v167, %v180
    %v182 = vcombine.high %v174, %v174
    %vm189 = vcmask 130048
    %v190 = vsel %vm189, %v181, 0
    %192 = vmatprep.subr.mxu0 0.0
    %193 = vmatpush1.msra.mxu0 %v43
    %194 = vmatprep.subr.mxu0 0.0
    %195 = vmatpush1.msra.mxu0 %v44
    %196 = vmatprep.subr.mxu0 0.0
    %197 = vmatpush1.msra.mxu0 %v45
    %198 = vmatprep.subr.mxu0 0.0
    %199 = vmatpush1.msra.mxu0 %v46
    %200 = vmatprep.subr.mxu0 0.0
    %201 = vmatpush1.msra.mxu0 %v47
    %202 = vmatprep.subr.mxu0 0.0
    %203 = vmatpush1.msra.mxu0 %v48
    %204 = vmatprep.subr.mxu0 0.0
    %205 = vmatpush1.msra.mxu0 %v49
    %206 = vmatprep.subr.mxu0 0.0
    %207 = vmatpush1.msra.mxu0 %v50
    %208 = vmatprep.subr.mxu0 0.0
    %209 = vmatpush1.msra.mxu0 %v51
    %210 = vmatprep.subr.mxu0 0.0
    %211 = vmatpush1.msra.mxu0 %v52
    %212 = vmatprep.subr.mxu0 0.0
    %213 = vmatpush1.msra.mxu0 %v53
    %214 = vmatprep.subr.mxu0 0.0
    %215 = vmatpush1.msra.mxu0 %v54
    %216 = vmatprep.subr.mxu0 0.0
    %217 = vmatpush1.msra.mxu0 %v55
    %218 = vmatprep.subr.mxu0 0.0
    %219 = vmatpush1.msra.mxu0 %v56
    %220 = vmatprep.subr.mxu0 0.0
    %221 = vmatpush1.msra.mxu0 %v57
    %222 = vmatprep.subr.mxu0 0.0
    %223 = vmatpush1.msra.mxu0 %v58
    %224 = vmatprep.subr.mxu0 0.0
    %225 = vmatpush1.msra.mxu0 %v59
    %226 = vmatprep.subr.mxu0 0.0
    %227 = vmatpush1.msra.mxu0 %v60
    %228 = vmatprep.subr.mxu0 0.0
    %229 = vmatpush1.msra.mxu0 %v61
    %230 = vmatprep.subr.mxu0 0.0
    %231 = vmatpush1.msra.mxu0 %v62
    %232 = vmatprep.subr.mxu0 0.0
    %233 = vmatpush1.msra.mxu0 %v63
    %234 = vmatprep.subr.mxu0 0.0
    %235 = vmatpush1.msra.mxu0 %v64
    %236 = vmatprep.subr.mxu0 0.0
    %237 = vmatpush1.msra.mxu0 %v65
    %238 = vmatprep.subr.mxu0 0.0
    %239 = vmatpush1.msra.mxu0 %v66
    %240 = vmatprep.subr.mxu0 0.0
    %241 = vmatpush1.msra.mxu0 %v67
    %242 = vmatprep.subr.mxu0 0.0
    %243 = vmatpush1.msra.mxu0 %v68
    %244 = vmatprep.subr.mxu0 0.0
    %245 = vmatpush1.msra.mxu0 %v69
    %246 = vmatprep.subr.mxu0 0.0
    %247 = vmatpush1.msra.mxu0 %v70
    %248 = vmatprep.subr.mxu0 0.0
    %249 = vmatpush1.msra.mxu0 %v71
    %250 = vmatprep.subr.mxu0 0.0
    %251 = vmatpush1.msra.mxu0 %v72
    %252 = vmatprep.subr.mxu0 0.0
    %253 = vmatpush1.msra.mxu0 %v73
    %254 = vmatprep.subr.mxu0 0.0
    %255 = vmatpush1.msra.mxu0 %v74
    %256 = vmatprep.mubr.f32.mxu0 %v165
    %257 = vmatmul.mubr.f32.gmra.mrb[0].mxu0 %v157
    %v258 = vpop.f32.mrb[0].mxu0
    %v259 = vadd.f32 %v146, %v258
    %v260 = vpop.f32.mrb[0].mxu0
    %261 = vdwg.mxu0
    %262 = vmatprep.subr.mxu0 0.0
    %263 = vmatpush1.msra.mxu0 %v75
    %264 = vmatprep.subr.mxu0 0.0
    %265 = vmatpush1.msra.mxu0 %v76
    %266 = vmatprep.subr.mxu0 0.0
    %267 = vmatpush1.msra.mxu0 %v77
    %268 = vmatprep.subr.mxu0 0.0
    %269 = vmatpush1.msra.mxu0 %v78
    %270 = vmatprep.subr.mxu0 0.0
    %271 = vmatpush1.msra.mxu0 %v79
    %272 = vmatprep.subr.mxu0 0.0
    %273 = vmatpush1.msra.mxu0 %v80
    %274 = vmatprep.subr.mxu0 0.0
    %275 = vmatpush1.msra.mxu0 %v81
    %276 = vmatprep.subr.mxu0 0.0
    %277 = vmatpush1.msra.mxu0 %v82
    %278 = vmatprep.subr.mxu0 0.0
    %279 = vmatpush1.msra.mxu0 %v83
    %280 = vmatprep.subr.mxu0 0.0
    %281 = vmatpush1.msra.mxu0 %v84
    %282 = vmatprep.subr.mxu0 0.0
    %283 = vmatpush1.msra.mxu0 %v85
    %284 = vmatprep.subr.mxu0 0.0
    %285 = vmatpush1.msra.mxu0 %v86
    %286 = vmatprep.subr.mxu0 0.0
    %287 = vmatpush1.msra.mxu0 %v87
    %288 = vmatprep.subr.mxu0 0.0
    %289 = vmatpush1.msra.mxu0 %v88
    %290 = vmatprep.subr.mxu0 0.0
    %291 = vmatpush1.msra.mxu0 %v89
    %292 = vmatprep.subr.mxu0 0.0
    %293 = vmatpush1.msra.mxu0 %v90
    %294 = vmatprep.subr.mxu0 0.0
    %295 = vmatpush1.msra.mxu0 %v91
    %296 = vmatprep.subr.mxu0 0.0
    %297 = vmatpush1.msra.mxu0 %v92
    %298 = vmatprep.subr.mxu0 0.0
    %299 = vmatpush1.msra.mxu0 %v93
    %300 = vmatprep.subr.mxu0 0.0
    %301 = vmatpush1.msra.mxu0 %v94
    %302 = vmatprep.subr.mxu0 0.0
    %303 = vmatpush1.msra.mxu0 %v95
    %304 = vmatprep.subr.mxu0 0.0
    %305 = vmatpush1.msra.mxu0 %v96
    %306 = vmatprep.subr.mxu0 0.0
    %307 = vmatpush1.msra.mxu0 %v97
    %308 = vmatprep.subr.mxu0 0.0
    %309 = vmatpush1.msra.mxu0 %v98
    %310 = vmatprep.subr.mxu0 0.0
    %311 = vmatpush1.msra.mxu0 %v99
    %312 = vmatprep.subr.mxu0 0.0
    %313 = vmatpush1.msra.mxu0 %v100
    %314 = vmatprep.subr.mxu0 0.0
    %315 = vmatpush1.msra.mxu0 %v101
    %316 = vmatprep.subr.mxu0 0.0
    %317 = vmatpush1.msra.mxu0 %v102
    %318 = vmatprep.subr.mxu0 0.0
    %319 = vmatpush1.msra.mxu0 %v103
    %320 = vmatprep.subr.mxu0 0.0
    %321 = vmatpush1.msra.mxu0 %v104
    %322 = vmatprep.subr.mxu0 0.0
    %323 = vmatpush1.msra.mxu0 %v105
    %324 = vmatprep.subr.mxu0 0.0
    %325 = vmatpush1.msra.mxu0 %v106
    %326 = vmatprep.mubr.f32.mxu0 %v166
    %327 = vmatmul.mubr.f32.gmra.mrb[0].mxu0 %v164
    %v328 = vpop.f32.mrb[0].mxu0
    %v329 = vadd.f32 %v259, %v328
    %v330 = vpop.f32.mrb[0].mxu0
    %331 = vdwg.mxu0
    %332 = vmatprep.subr.mxu0 0.0
    %333 = vmatpush1.msra.mxu0 %v107
    %334 = vmatprep.subr.mxu0 0.0
    %335 = vmatpush1.msra.mxu0 %v108
    %336 = vmatprep.subr.mxu0 0.0
    %337 = vmatpush1.msra.mxu0 %v109
    %338 = vmatprep.subr.mxu0 0.0
    %339 = vmatpush1.msra.mxu0 %v110
    %340 = vmatprep.subr.mxu0 0.0
    %341 = vmatpush1.msra.mxu0 %v111
    %342 = vmatprep.subr.mxu0 0.0
    %343 = vmatpush1.msra.mxu0 %v112
    %344 = vmatprep.subr.mxu0 0.0
    %345 = vmatpush1.msra.mxu0 %v113
    %346 = vmatprep.subr.mxu0 0.0
    %347 = vmatpush1.msra.mxu0 %v114
    %348 = vmatprep.subr.mxu0 0.0
    %349 = vmatpush1.msra.mxu0 %v115
    %350 = vmatprep.subr.mxu0 0.0
    %351 = vmatpush1.msra.mxu0 %v116
    %352 = vmatprep.subr.mxu0 0.0
    %353 = vmatpush1.msra.mxu0 %v117
    %354 = vmatprep.subr.mxu0 0.0
    %355 = vmatpush1.msra.mxu0 %v118
    %356 = vmatprep.subr.mxu0 0.0
    %357 = vmatpush1.msra.mxu0 %v119
    %358 = vmatprep.subr.mxu0 0.0
    %359 = vmatpush1.msra.mxu0 %v120
    %360 = vmatprep.subr.mxu0 0.0
    %361 = vmatpush1.msra.mxu0 %v121
    %362 = vmatprep.subr.mxu0 0.0
    %363 = vmatpush1.msra.mxu0 %v122
    %364 = vmatprep.subr.mxu0 0.0
    %365 = vmatpush1.msra.mxu0 %v123
    %366 = vmatprep.subr.mxu0 0.0
    %367 = vmatpush1.msra.mxu0 %v124
    %368 = vmatprep.subr.mxu0 0.0
    %369 = vmatpush1.msra.mxu0 %v125
    %370 = vmatprep.subr.mxu0 0.0
    %371 = vmatpush1.msra.mxu0 %v126
    %372 = vmatprep.subr.mxu0 0.0
    %373 = vmatpush1.msra.mxu0 %v127
    %374 = vmatprep.subr.mxu0 0.0
    %375 = vmatpush1.msra.mxu0 %v128
    %376 = vmatprep.subr.mxu0 0.0
    %377 = vmatpush1.msra.mxu0 %v129
    %378 = vmatprep.subr.mxu0 0.0
    %379 = vmatpush1.msra.mxu0 %v130
    %380 = vmatprep.subr.mxu0 0.0
    %381 = vmatpush1.msra.mxu0 %v131
    %382 = vmatprep.subr.mxu0 0.0
    %383 = vmatpush1.msra.mxu0 %v132
    %384 = vmatprep.subr.mxu0 0.0
    %385 = vmatpush1.msra.mxu0 %v133
    %386 = vmatprep.subr.mxu0 0.0
    %387 = vmatpush1.msra.mxu0 %v134
    %388 = vmatprep.subr.mxu0 0.0
    %389 = vmatpush1.msra.mxu0 %v135
    %390 = vmatprep.subr.mxu0 0.0
    %391 = vmatpush1.msra.mxu0 %v136
    %392 = vmatprep.subr.mxu0 0.0
    %393 = vmatpush1.msra.mxu0 %v137
    %394 = vmatprep.subr.mxu0 0.0
    %395 = vmatpush1.msra.mxu0 %v138
    %396 = vmatprep.mubr.f32.mxu0 %v182
    %397 = vmatmul.mubr.f32.gmra.mrb[0].mxu0 %v174
    %v398 = vpop.f32.mrb[0].mxu0
    %v399 = vadd.f32 %v329, %v398
    %v400 = vpop.f32.mrb[0].mxu0
    %401 = vdwg.mxu0
    %402 = vmatprep.subr.mxu0 0.0
    %403 = vmatpush1.msra.mxu0 %v139
    %404 = vmatprep.subr.mxu0 0.0
    %405 = vmatpush1.msra.mxu0 %v140
    %406 = vmatprep.subr.mxu0 0.0
    %407 = vmatpush1.msra.mxu0 0.0
    %408 = vmatprep.subr.mxu0 0.0
    %409 = vmatpush1.msra.mxu0 0.0
    %410 = vmatprep.subr.mxu0 0.0
    %411 = vmatpush1.msra.mxu0 0.0
    %412 = vmatprep.subr.mxu0 0.0
    %413 = vmatpush1.msra.mxu0 0.0
    %414 = vmatprep.subr.mxu0 0.0
    %415 = vmatpush1.msra.mxu0 0.0
    %416 = vmatprep.subr.mxu0 0.0
    %417 = vmatpush1.msra.mxu0 0.0
    %418 = vmatprep.subr.mxu0 0.0
    %419 = vmatpush1.msra.mxu0 0.0
    %420 = vmatprep.subr.mxu0 0.0
    %421 = vmatpush1.msra.mxu0 0.0
    %422 = vmatprep.subr.mxu0 0.0
    %423 = vmatpush1.msra.mxu0 0.0
    %424 = vmatprep.subr.mxu0 0.0
    %425 = vmatpush1.msra.mxu0 0.0
    %426 = vmatprep.subr.mxu0 0.0
    %427 = vmatpush1.msra.mxu0 0.0
    %428 = vmatprep.subr.mxu0 0.0
    %429 = vmatpush1.msra.mxu0 0.0
    %430 = vmatprep.subr.mxu0 0.0
    %431 = vmatpush1.msra.mxu0 0.0
    %432 = vmatprep.subr.mxu0 0.0
    %433 = vmatpush1.msra.mxu0 0.0
    %434 = vmatprep.subr.mxu0 0.0
    %435 = vmatpush1.msra.mxu0 0.0
    %436 = vmatprep.subr.mxu0 0.0
    %437 = vmatpush1.msra.mxu0 0.0
    %438 = vmatprep.subr.mxu0 0.0
    %439 = vmatpush1.msra.mxu0 0.0
    %440 = vmatprep.subr.mxu0 0.0
    %441 = vmatpush1.msra.mxu0 0.0
    %442 = vmatprep.subr.mxu0 0.0
    %443 = vmatpush1.msra.mxu0 0.0
    %444 = vmatprep.subr.mxu0 0.0
    %445 = vmatpush1.msra.mxu0 0.0
    %446 = vmatprep.subr.mxu0 0.0
    %447 = vmatpush1.msra.mxu0 0.0
    %448 = vmatprep.subr.mxu0 0.0
    %449 = vmatpush1.msra.mxu0 0.0
    %450 = vmatprep.subr.mxu0 0.0
    %451 = vmatpush1.msra.mxu0 0.0
    %452 = vmatprep.subr.mxu0 0.0
    %453 = vmatpush1.msra.mxu0 0.0
    %454 = vmatprep.subr.mxu0 0.0
    %455 = vmatpush1.msra.mxu0 0.0
    %456 = vmatprep.subr.mxu0 0.0
    %457 = vmatpush1.msra.mxu0 0.0
    %458 = vmatprep.subr.mxu0 0.0
    %459 = vmatpush1.msra.mxu0 0.0
    %460 = vmatprep.subr.mxu0 0.0
    %461 = vmatpush1.msra.mxu0 0.0
    %462 = vmatprep.subr.mxu0 0.0
    %463 = vmatpush1.msra.mxu0 0.0
    %464 = vmatprep.subr.mxu0 0.0
    %465 = vmatpush1.msra.mxu0 0.0
    %466 = vmatprep.mubr.f32.mxu0 0.0
    %467 = vmatmul.mubr.f32.gmra.mrb[0].mxu0 %v190
    %v468 = vpop.f32.mrb[0].mxu0
    %v469 = vadd.f32 %v399, %v468
    %v470 = vpop.f32.mrb[0].mxu0
    %471 = vdwg.mxu0
    %v472 = vmax.f32 %v469, 0.0
    %473 = vst [vmem:[#allocation7] sm:$0x3] %v472
    // Predicated region
    $region22: #{tpu_custom_call.1} parent=1 // pred_check
      _
    $region23: #{tpu_custom_call.1} parent=1 // pred_check_branch
      %475 = sbr.rel (0) target = $region25
    $region24: #{tpu_custom_call.1} parent=1 // pred_region
      %s477 = ssub.s32 32, 32
      %478 = vsyncadd [#allocation4], %s477
      %s480 = sshll.u32 [#allocation7], 4
      %s481 = int_to_ptr.vmem [resolvable:$true] %s480
      %483 = dma.vmem_to_hbm [thread:$0]  %s481, 32, %s3, [#allocation4]
    $region25: #{tpu_custom_call.1} parent=1 // pred_fallthru
      _
    // Predicated region
    $region26: #{tpu_custom_call.1} parent=1 // pred_check
      _
    $region27: #{tpu_custom_call.1} parent=1 // pred_check_branch
      %485 = sbr.rel (0) target = $region29
    $region28: #{tpu_custom_call.1} parent=1 // pred_region
      %486 = dma.done [#allocation4], 32
    $region29: #{tpu_custom_call.1} parent=1 // pred_fallthru
      _
    %487 = vsyncpa [#allocation3], 1
    %488 = vsyncpa [#allocation6], 1
    %489 = vsyncpa [#allocation4], 1

</llo_original>
